<compile_context>
chip_gen: v7x
topology: tpu7x:2x2x1
jax: 0.10.0
libtpu: 0.0.40
codegen_flags: <defaults>
</compile_context>

<pallas_src>
import jax
import jax.numpy as jnp
from jax.experimental import pallas as pl
from jax.experimental.pallas import tpu as pltpu


# ----------------------------------------------------------------------------- kernels

def _onehot_argmax_rowmajor_kernel(x_ref, o_ref):
    """Generic path: blocks are (tm, N); argmax over the (lane-mapped) last axis."""
    x = x_ref[...]                                            # (tm, N)
    n = x.shape[-1]
    m = jnp.max(x, axis=-1, keepdims=True)                    # row max
    idx = jax.lax.broadcasted_iota(jnp.int32, x.shape, x.ndim - 1)
    is_max = x == m
    # first index attaining the max (torch.argmax tie-break: first occurrence)
    # TODO(synk): jnp.argmax would be a single index-tracking reduction, but lowers to
    # a variadic lax.reduce that Mosaic may reject; keep the two-reduction form.
    amax = jnp.min(jnp.where(is_max, idx, n), axis=-1, keepdims=True)
    o_ref[...] = (idx == amax).astype(o_ref.dtype)


def _make_packed_onehot_kernel(n: int):
    """Lane-dense path: blocks are (tm, 128); each 128-lane row holds 128//n contiguous
    segments of length n.  First-argmax per segment via inclusive prefix/suffix max
    scans (Hillis-Steele) built from segment-masked rolls: 2*log2(n)+1 XLU rolls."""

    def kernel(x_ref, o_ref):
        x = x_ref[...]                                        # (tm, 128)
        axis = x.ndim - 1
        lanes = x.shape[-1]                                   # 128
        lane = jax.lax.broadcasted_iota(jnp.int32, x.shape, axis)
        pos = lane % n                                        # position within segment

        if jnp.issubdtype(x.dtype, jnp.floating):
            fill = jnp.asarray(-jnp.inf, dtype=x.dtype)
        else:
            fill = jnp.asarray(jnp.iinfo(x.dtype).min, dtype=x.dtype)

        def shift_down(v, s):
            # result[i] = v[i - s] within the segment; `fill` in the first s lanes.
            return jnp.where(pos >= s, pltpu.roll(v, shift=s, axis=axis), fill)

        def shift_up(v, s):
            # result[i] = v[i + s] within the segment; `fill` in the last s lanes.
            return jnp.where(pos < n - s,
                             pltpu.roll(v, shift=lanes - s, axis=axis), fill)

        # Inclusive prefix / suffix max within each length-n segment.
        p = x
        sfx = x
        s = 1
        while s < n:                                          # log2(n) steps, unrolled
            p = jnp.maximum(p, shift_down(p, s))
            sfx = jnp.maximum(sfx, shift_up(sfx, s))
            s *= 2

        seg_max = jnp.maximum(p, sfx)                         # segment max at every lane
        p_excl = shift_down(p, 1)                             # max over strictly-earlier
        is_max = x == seg_max
        # first occurrence: no strictly-earlier element already reached the max
        first = is_max & ((pos == 0) | (p_excl < seg_max))
        o_ref[...] = first.astype(o_ref.dtype)

    return kernel


# ----------------------------------------------------------------------------- wrapper

def _round_up(v, m):
    return ((v + m - 1) // m) * m


def _vmem_capacity_bytes():
    try:
        return int(pltpu.get_tpu_info().vmem_capacity_bytes)
    except Exception:
        return 64 * 1024 * 1024


def _auto_block_bytes():
    # Per-block budget.  in+out, double-buffered => ~4 block-sized buffers live in
    # VMEM.  vmem/8 capped at 8 MiB => 32 MiB pipelined footprint: inside v7x's 64 MiB
    # physical VMEM and comfortable on v5e/v6e (128 MiB), while keeping the per-step
    # fixed overhead (~0.35us) a few percent of the HBM stream time on every chip.
    vmem = _vmem_capacity_bytes()
    return int(min(8 * 1024 * 1024, max(2 * 1024 * 1024, vmem // 8)))


def _ste_forward(x, *, block_bytes=None):
    """Forward pass of StraightThroughEstimator (one-hot argmax over the last dim)."""
    orig_shape = x.shape
    n = orig_shape[-1]
    r = 1
    for d in orig_shape[:-1]:
        r *= d

    itemsize = jnp.dtype(x.dtype).itemsize
    row_align = max(8, 32 // itemsize)        # sublanes per vreg (8 f32, 16 bf16, 32 i8)
    if block_bytes is None:
        block_bytes = _auto_block_bytes()

    # Lane-dense repack for small power-of-two last dims (e.g. N=16/32/64): flatten and,
    # if needed, pad to a multiple of 128 elements (padding is a whole number of fake
    # segments since n | 128; their outputs are sliced off afterwards).
    use_packed = (n < 128) and (128 % n == 0)
    total = r * n
    padded = 0
    if use_packed:
        padded_total = _round_up(max(total, 1), 128)
        padded = padded_total - total
        x_flat = x.reshape(total)
        if padded:
            x_flat = jnp.pad(x_flat, (0, padded))
        rows, ncols = padded_total // 128, 128
        x2 = x_flat.reshape(rows, ncols)
        kernel = _make_packed_onehot_kernel(n)
    else:
        rows, ncols = r, n
        x2 = x.reshape(rows, ncols)
        kernel = _onehot_argmax_rowmajor_kernel

    # Row tile from the VMEM budget; cdiv grid handles the ragged last block.
    # TODO(synk): for extremely large N (a single aligned row tile exceeds the VMEM
    # budget), add an N-tiled "arbitrary" grid axis with a running (max, argmin) scratch.
    bytes_per_row = ncols * itemsize
    total_bytes = rows * ncols * itemsize
    tm = max(1, block_bytes // bytes_per_row)
    tm = max(row_align, (tm // row_align) * row_align)
    if total_bytes > (1 << 20) and rows > 4 * row_align:
        # Keep >= ~4 grid steps so v7x's two TensorCores both get work and input-DMA /
        # compute / output-DMA overlap even when the whole input would fit one block.
        tm = min(tm, _round_up(pl.cdiv(rows, 4), row_align))
    tm = min(tm, rows)
    grid = (pl.cdiv(rows, tm),)

    # Scoped VMEM: cover the pipelined footprint with headroom, stay within a safe
    # fraction of the chip's physical VMEM (~48 MiB on v7x, ~96 MiB on v5e/v6e).
    needed = 4 * tm * ncols * itemsize + (1 << 20)
    cap = min((_vmem_capacity_bytes() * 3) // 4, 96 * 1024 * 1024)
    vmem_limit = int(min(max(32 * 1024 * 1024, needed), cap))

    out2 = pl.pallas_call(
        kernel,
        out_shape=jax.ShapeDtypeStruct((rows, ncols), x.dtype),
        grid_spec=pltpu.PrefetchScalarGridSpec(
            num_scalar_prefetch=0,
            grid=grid,
            in_specs=[pl.BlockSpec((tm, ncols), lambda i: (i, 0))],
            out_specs=pl.BlockSpec((tm, ncols), lambda i: (i, 0)),
        ),
        compiler_params=pltpu.CompilerParams(
            dimension_semantics=("parallel",),     # shards row blocks across TCs on v7x
            vmem_limit_bytes=vmem_limit,
        ),
        cost_estimate=pl.CostEstimate(
            flops=2 * rows * ncols,
            transcendentals=0,
            bytes_accessed=2 * rows * ncols * itemsize,
        ),
    )(x2)

    if use_packed:
        return out2.reshape(-1)[:total].reshape(orig_shape)
    return out2.reshape(orig_shape)


# STE: forward = one-hot argmax (Pallas), backward = identity (gradient passthrough).
@jax.custom_vjp
def straight_through_estimator(x):
    return _ste_forward(x)


def _ste_vjp_fwd(x):
    return _ste_forward(x), None


def _ste_vjp_bwd(_, g):
    return (g,)


straight_through_estimator.defvjp(_ste_vjp_fwd, _ste_vjp_bwd)


# ----------------------------------------------------------------------------- test

if __name__ == "__main__":
    key = jax.random.PRNGKey(0)
    k1, k2, k3, k4 = jax.random.split(key, 4)

    def _ref(x):
        return jax.nn.one_hot(jnp.argmax(x, axis=-1), x.shape[-1], dtype=x.dtype)

    # 1) Module-typical shape (small power-of-two last dim) -> lane-dense packed path.
    x1 = jax.random.normal(k1, (2, 4, 16, 16), dtype=jnp.float32)
    y1 = jax.block_until_ready(straight_through_estimator(x1))
    assert y1.shape == x1.shape and y1.dtype == x1.dtype
    assert bool(jnp.all(y1 == _ref(x1)))

    # 2) Packed path with a padded tail (3*5*16 = 240 elements, not a multiple of 128).
    x2 = jax.random.normal(k2, (3, 5, 16), dtype=jnp.float32)
    y2 = jax.block_until_ready(straight_through_estimator(x2))
    assert bool(jnp.all(y2 == _ref(x2)))

    # 3) Generic row-major path (last dim not packable into 128 lanes).
    x3 = jax.random.normal(k3, (3, 5, 200), dtype=jnp.float32)
    y3 = jax.block_until_ready(straight_through_estimator(x3))
    assert bool(jnp.all(y3 == _ref(x3)))

    # 4) Multi-block grid with a ragged last block (tiny tile forced on purpose).
    x4 = jax.random.normal(k4, (1000, 16), dtype=jnp.float32)
    y4 = jax.block_until_ready(_ste_forward(x4, block_bytes=4096))
    assert bool(jnp.all(y4 == _ref(x4)))

    # 5) Straight-through gradient: identity passthrough of the output cotangent.
    w = jnp.arange(16.0)
    g = jax.grad(lambda v: jnp.sum(straight_through_estimator(v) * w))(x1[0, 0])
    g = jax.block_until_ready(g)
    assert bool(jnp.all(g == jnp.broadcast_to(w, g.shape)))

    print("KERNEL_OK")
</pallas_src>

<mosaic_0001>
module attributes {stable_mosaic.version = 11 : i64} {
  func.func @kernel(%arg0: i32, %arg1: memref<16x128xf32, #tpu.memory_space<vmem>>, %arg2: memref<16x128xf32, #tpu.memory_space<vmem>>) attributes {dimension_semantics = [#tpu.dimension_semantics<parallel>], iteration_bounds = array<i64: 1>, scalar_prefetch = 0 : i64, scratch_operands = 0 : i64, tpu.core_type = #tpu.core_type<tc>, window_params = [{transform_indices = @transform_0, window_bounds = array<i64: 16, 128>}, {transform_indices = @transform_1, window_bounds = array<i64: 16, 128>}]} {
    %c0 = arith.constant 0 : index
    %c0_0 = arith.constant 0 : index
    %0 = vector.load %arg1[%c0, %c0_0] : memref<16x128xf32, #tpu.memory_space<vmem>>, vector<16x128xf32>
    %1 = tpu.iota {dimensions = array<i32: 1>} : vector<16x128xi32>
    %c16_i32 = arith.constant 16 : i32
    %c0_i32 = arith.constant 0 : i32
    %2 = arith.cmpi eq, %c16_i32, %c0_i32 : i32
    %c1_i32 = arith.constant 1 : i32
    %3 = arith.select %2, %c1_i32, %c16_i32 : i32
    %4 = vector.broadcast %3 : i32 to vector<16x128xi32>
    %5 = arith.remsi %1, %4 : vector<16x128xi32>
    %c0_i32_1 = arith.constant 0 : i32
    %6 = vector.broadcast %c0_i32_1 : i32 to vector<16x128xi32>
    %7 = arith.cmpi ne, %5, %6 : vector<16x128xi32>
    %c0_i32_2 = arith.constant 0 : i32
    %8 = vector.broadcast %c0_i32_2 : i32 to vector<16x128xi32>
    %9 = arith.cmpi slt, %5, %8 : vector<16x128xi32>
    %c0_i32_3 = arith.constant 0 : i32
    %10 = arith.cmpi slt, %3, %c0_i32_3 : i32
    %11 = vector.broadcast %10 : i1 to vector<16x128xi1>
    %12 = vector.broadcast %11 : vector<16x128xi1> to vector<16x128xi1>
    %13 = arith.xori %9, %12 : vector<16x128xi1>
    %14 = arith.andi %13, %7 : vector<16x128xi1>
    %15 = vector.broadcast %3 : i32 to vector<16x128xi32>
    %16 = arith.addi %5, %15 : vector<16x128xi32>
    %17 = arith.select %14, %16, %5 : vector<16x128xi1>, vector<16x128xi32>
    %c1_i32_4 = arith.constant 1 : i32
    %18 = vector.broadcast %c1_i32_4 : i32 to vector<16x128xi32>
    %19 = arith.cmpi sge, %17, %18 : vector<16x128xi32>
    %c1_i32_5 = arith.constant 1 : i32
    %20 = tpu.dynamic_rotate %0 by %c1_i32_5 dim 1 : vector<16x128xf32>, i32 -> vector<16x128xf32>
    %cst = arith.constant 0xFF800000 : f32
    %21 = vector.broadcast %cst : f32 to vector<16x128xf32>
    %22 = arith.select %19, %20, %21 : vector<16x128xi1>, vector<16x128xf32>
    %23 = arith.maximumf %0, %22 : vector<16x128xf32>
    %c15_i32 = arith.constant 15 : i32
    %24 = vector.broadcast %c15_i32 : i32 to vector<16x128xi32>
    %25 = arith.cmpi slt, %17, %24 : vector<16x128xi32>
    %c127_i32 = arith.constant 127 : i32
    %26 = tpu.dynamic_rotate %0 by %c127_i32 dim 1 : vector<16x128xf32>, i32 -> vector<16x128xf32>
    %cst_6 = arith.constant 0xFF800000 : f32
    %27 = vector.broadcast %cst_6 : f32 to vector<16x128xf32>
    %28 = arith.select %25, %26, %27 : vector<16x128xi1>, vector<16x128xf32>
    %29 = arith.maximumf %0, %28 : vector<16x128xf32>
    %c2_i32 = arith.constant 2 : i32
    %30 = vector.broadcast %c2_i32 : i32 to vector<16x128xi32>
    %31 = arith.cmpi sge, %17, %30 : vector<16x128xi32>
    %c2_i32_7 = arith.constant 2 : i32
    %32 = tpu.dynamic_rotate %23 by %c2_i32_7 dim 1 : vector<16x128xf32>, i32 -> vector<16x128xf32>
    %cst_8 = arith.constant 0xFF800000 : f32
    %33 = vector.broadcast %cst_8 : f32 to vector<16x128xf32>
    %34 = arith.select %31, %32, %33 : vector<16x128xi1>, vector<16x128xf32>
    %35 = arith.maximumf %23, %34 : vector<16x128xf32>
    %c14_i32 = arith.constant 14 : i32
    %36 = vector.broadcast %c14_i32 : i32 to vector<16x128xi32>
    %37 = arith.cmpi slt, %17, %36 : vector<16x128xi32>
    %c126_i32 = arith.constant 126 : i32
    %38 = tpu.dynamic_rotate %29 by %c126_i32 dim 1 : vector<16x128xf32>, i32 -> vector<16x128xf32>
    %cst_9 = arith.constant 0xFF800000 : f32
    %39 = vector.broadcast %cst_9 : f32 to vector<16x128xf32>
    %40 = arith.select %37, %38, %39 : vector<16x128xi1>, vector<16x128xf32>
    %41 = arith.maximumf %29, %40 : vector<16x128xf32>
    %c4_i32 = arith.constant 4 : i32
    %42 = vector.broadcast %c4_i32 : i32 to vector<16x128xi32>
    %43 = arith.cmpi sge, %17, %42 : vector<16x128xi32>
    %c4_i32_10 = arith.constant 4 : i32
    %44 = tpu.dynamic_rotate %35 by %c4_i32_10 dim 1 : vector<16x128xf32>, i32 -> vector<16x128xf32>
    %cst_11 = arith.constant 0xFF800000 : f32
    %45 = vector.broadcast %cst_11 : f32 to vector<16x128xf32>
    %46 = arith.select %43, %44, %45 : vector<16x128xi1>, vector<16x128xf32>
    %47 = arith.maximumf %35, %46 : vector<16x128xf32>
    %c12_i32 = arith.constant 12 : i32
    %48 = vector.broadcast %c12_i32 : i32 to vector<16x128xi32>
    %49 = arith.cmpi slt, %17, %48 : vector<16x128xi32>
    %c124_i32 = arith.constant 124 : i32
    %50 = tpu.dynamic_rotate %41 by %c124_i32 dim 1 : vector<16x128xf32>, i32 -> vector<16x128xf32>
    %cst_12 = arith.constant 0xFF800000 : f32
    %51 = vector.broadcast %cst_12 : f32 to vector<16x128xf32>
    %52 = arith.select %49, %50, %51 : vector<16x128xi1>, vector<16x128xf32>
    %53 = arith.maximumf %41, %52 : vector<16x128xf32>
    %c8_i32 = arith.constant 8 : i32
    %54 = vector.broadcast %c8_i32 : i32 to vector<16x128xi32>
    %55 = arith.cmpi sge, %17, %54 : vector<16x128xi32>
    %c8_i32_13 = arith.constant 8 : i32
    %56 = tpu.dynamic_rotate %47 by %c8_i32_13 dim 1 : vector<16x128xf32>, i32 -> vector<16x128xf32>
    %cst_14 = arith.constant 0xFF800000 : f32
    %57 = vector.broadcast %cst_14 : f32 to vector<16x128xf32>
    %58 = arith.select %55, %56, %57 : vector<16x128xi1>, vector<16x128xf32>
    %59 = arith.maximumf %47, %58 : vector<16x128xf32>
    %c8_i32_15 = arith.constant 8 : i32
    %60 = vector.broadcast %c8_i32_15 : i32 to vector<16x128xi32>
    %61 = arith.cmpi slt, %17, %60 : vector<16x128xi32>
    %c120_i32 = arith.constant 120 : i32
    %62 = tpu.dynamic_rotate %53 by %c120_i32 dim 1 : vector<16x128xf32>, i32 -> vector<16x128xf32>
    %cst_16 = arith.constant 0xFF800000 : f32
    %63 = vector.broadcast %cst_16 : f32 to vector<16x128xf32>
    %64 = arith.select %61, %62, %63 : vector<16x128xi1>, vector<16x128xf32>
    %65 = arith.maximumf %53, %64 : vector<16x128xf32>
    %66 = arith.maximumf %59, %65 : vector<16x128xf32>
    %c1_i32_17 = arith.constant 1 : i32
    %67 = vector.broadcast %c1_i32_17 : i32 to vector<16x128xi32>
    %68 = arith.cmpi sge, %17, %67 : vector<16x128xi32>
    %c1_i32_18 = arith.constant 1 : i32
    %69 = tpu.dynamic_rotate %59 by %c1_i32_18 dim 1 : vector<16x128xf32>, i32 -> vector<16x128xf32>
    %cst_19 = arith.constant 0xFF800000 : f32
    %70 = vector.broadcast %cst_19 : f32 to vector<16x128xf32>
    %71 = arith.select %68, %69, %70 : vector<16x128xi1>, vector<16x128xf32>
    %72 = arith.cmpf oeq, %0, %66 : vector<16x128xf32>
    %c0_i32_20 = arith.constant 0 : i32
    %73 = vector.broadcast %c0_i32_20 : i32 to vector<16x128xi32>
    %74 = arith.cmpi eq, %17, %73 : vector<16x128xi32>
    %75 = arith.cmpf olt, %71, %66 : vector<16x128xf32>
    %76 = arith.ori %74, %75 : vector<16x128xi1>
    %77 = arith.andi %72, %76 : vector<16x128xi1>
    %78 = arith.extui %77 : vector<16x128xi1> to vector<16x128xi32>
    %79 = arith.sitofp %78 : vector<16x128xi32> to vector<16x128xf32>
    %c0_21 = arith.constant 0 : index
    %c0_22 = arith.constant 0 : index
    %80 = vector.load %arg2[%c0_21, %c0_22] : memref<16x128xf32, #tpu.memory_space<vmem>>, vector<16x128xf32>
    tpu.vector_store %arg2[%c0_21, %c0_22], %79 {strides = array<i32>} : memref<16x128xf32, #tpu.memory_space<vmem>>, vector<16x128xf32>,
    return
  }
  func.func @transform_0(%arg0: i32) -> (i32, i32) {
    %c0_i32 = arith.constant 0 : i32
    %c0_i32_0 = arith.constant 0 : i32
    return %arg0, %c0_i32 : i32, i32
  }
  func.func @transform_1(%arg0: i32) -> (i32, i32) {
    %c0_i32 = arith.constant 0 : i32
    %c0_i32_0 = arith.constant 0 : i32
    return %arg0, %c0_i32 : i32, i32
  }
}

</mosaic_0001>

<llo_original>
// kernel: tpu_custom_call.1
$region0: #{tpu_custom_call.1}
  #allocation0 [shape = 'u32[]', space=smem, size = 0x4, offset = 0x4, fixed_abs, tag = 'smem constant byte address 0x4 - core index']
  #allocation1 [shape = 'u32[144,128]{1,0:T(1,128)}', space=vmem, size = 0x12000, scoped, tag = 'internal scratch']
  %s0 = inlined_call_operand.hbm [shape: f32[16,128], index: 0, kind: input, shape index: {}]
  %s1 = inlined_call_operand.hbm [shape: f32[16,128], index: 1, kind: output, shape index: {}]
  %s2 = sld [smem:[#allocation0]]
  $region18: #{tpu_custom_call.1} parent=0
    _
  %s4 = ssub.s32 1, %s2
  %s5 = scalar_select 0, %s4, %s2
  $region1: #{tpu_custom_call.1} parent=0
    #allocation2 [shape = 'u8[8192]{0}', space=vmem, size = 0x2000, scoped, tag = 'input window, operand 0, single buffered']
    #allocation3 [shape = 's32[1]{0}', space=sflag, size = 0x4, scoped, tag = 'scoped memory for tpu_custom_call.1']
    #allocation4 [shape = 's32[1]{0}', space=sflag, size = 0x4, scoped, tag = 'scoped memory for tpu_custom_call.1']
    #allocation5 [shape = 'u8[8192]{0}', space=vmem, size = 0x2000, scoped, tag = 'output window, operand 0, single buffered']
    %6 = vsyncpa [#allocation3], 0
    %7 = vsyncpa [#allocation4], 0
    // Predicated region
    $region2: #{tpu_custom_call.1} parent=1 // pred_check
      _
    $region3: #{tpu_custom_call.1} parent=1 // pred_check_branch
      %9 = sbr.rel (0) target = $region5
    $region4: #{tpu_custom_call.1} parent=1 // pred_region
      %s11 = ssub.s32 256, 256
      %12 = vsyncadd [#allocation3], %s11
      %s13 = sshll.u32 [#allocation2], 4
      %s14 = int_to_ptr.vmem [resolvable:$true] %s13
      %19 = dma.hbm_to_vmem [thread:$0]  %s0, 256, %s14, [#allocation3], 128, 128, 8
    $region5: #{tpu_custom_call.1} parent=1 // pred_fallthru
      _
    // Predicated region
    $region6: #{tpu_custom_call.1} parent=1 // pred_check
      _
    $region7: #{tpu_custom_call.1} parent=1 // pred_check_branch
      %21 = sbr.rel (0) target = $region9
    $region8: #{tpu_custom_call.1} parent=1 // pred_region
      %22 = dma.done [#allocation3], 256
    $region9: #{tpu_custom_call.1} parent=1 // pred_fallthru
      _
    %v23 = vld [vmem:[#allocation2] sm:$0xff]
    %v24 = vld [vmem:[#allocation2 + $0x8] sm:$0xff]
    %v25 = vlaneseq
    %v26 = vand.u32 %v25, 127
    %vm27 = vcmp.lt.s32.totalorder %v26, 0
    %v28 = vsub.s32 0, %v26
    %v29 = vsel %vm27, %v28, %v26
    %v30 = vshrl.u32 %v29, 4
    %v31 = vand.u32 %v29, 15
    %v32 = vsub.s32 0, %v31
    %v33 = vsel %vm27, %v32, %v31
    %vm34 = vcmp.ne.s32.totalorder %v33, 0
    %vm35 = vcmp.lt.s32.totalorder %v33, 0
    %vm36 = vmand %vm35, %vm34
    %v37 = vadd.s32 %v33, 16
    %v38 = vsel %vm36, %v37, %v33
    %vm39 = vcmp.ge.s32.totalorder %v38, 1
    %40 = vrot.lane.b32.xlu0 %v23, 1
    %v41 = vpop.permute.xlu0 %40
    %42 = vrot.lane.b32.xlu0 %v24, 1
    %v43 = vpop.permute.xlu0 %42
    %v44 = vsel %vm39, %v41, -inf
    %v45 = vsel %vm39, %v43, -inf
    %v46 = vmax.f32 %v23, %v44
    %v47 = vmax.f32 %v24, %v45
    %vm48 = vcmp.lt.s32.totalorder %v38, 15
    %49 = vrot.lane.b32.xlu0 %v23, 127
    %v50 = vpop.permute.xlu0 %49
    %51 = vrot.lane.b32.xlu0 %v24, 127
    %v52 = vpop.permute.xlu0 %51
    %v53 = vsel %vm48, %v50, -inf
    %v54 = vsel %vm48, %v52, -inf
    %v55 = vmax.f32 %v23, %v53
    %v56 = vmax.f32 %v24, %v54
    %vm57 = vcmp.ge.s32.totalorder %v38, 2
    %58 = vrot.lane.b32.xlu0 %v46, 2
    %v59 = vpop.permute.xlu0 %58
    %60 = vrot.lane.b32.xlu0 %v47, 2
    %v61 = vpop.permute.xlu0 %60
    %v62 = vsel %vm57, %v59, -inf
    %v63 = vsel %vm57, %v61, -inf
    %v64 = vmax.f32 %v46, %v62
    %v65 = vmax.f32 %v47, %v63
    %vm66 = vcmp.lt.s32.totalorder %v38, 14
    %67 = vrot.lane.b32.xlu0 %v55, 126
    %v68 = vpop.permute.xlu0 %67
    %69 = vrot.lane.b32.xlu0 %v56, 126
    %v70 = vpop.permute.xlu0 %69
    %v71 = vsel %vm66, %v68, -inf
    %v72 = vsel %vm66, %v70, -inf
    %v73 = vmax.f32 %v55, %v71
    %v74 = vmax.f32 %v56, %v72
    %vm75 = vcmp.ge.s32.totalorder %v38, 4
    %76 = vrot.lane.b32.xlu0 %v64, 4
    %v77 = vpop.permute.xlu0 %76
    %78 = vrot.lane.b32.xlu0 %v65, 4
    %v79 = vpop.permute.xlu0 %78
    %v80 = vsel %vm75, %v77, -inf
    %v81 = vsel %vm75, %v79, -inf
    %v82 = vmax.f32 %v64, %v80
    %v83 = vmax.f32 %v65, %v81
    %vm84 = vcmp.lt.s32.totalorder %v38, 12
    %85 = vrot.lane.b32.xlu0 %v73, 124
    %v86 = vpop.permute.xlu0 %85
    %87 = vrot.lane.b32.xlu0 %v74, 124
    %v88 = vpop.permute.xlu0 %87
    %v89 = vsel %vm84, %v86, -inf
    %v90 = vsel %vm84, %v88, -inf
    %v91 = vmax.f32 %v73, %v89
    %v92 = vmax.f32 %v74, %v90
    %vm93 = vcmp.ge.s32.totalorder %v38, 8
    %94 = vrot.lane.b32.xlu0 %v82, 8
    %v95 = vpop.permute.xlu0 %94
    %96 = vrot.lane.b32.xlu0 %v83, 8
    %v97 = vpop.permute.xlu0 %96
    %v98 = vsel %vm93, %v95, -inf
    %v99 = vsel %vm93, %v97, -inf
    %v100 = vmax.f32 %v82, %v98
    %v101 = vmax.f32 %v83, %v99
    %vm102 = vcmp.lt.s32.totalorder %v38, 8
    %103 = vrot.lane.b32.xlu0 %v91, 120
    %v104 = vpop.permute.xlu0 %103
    %105 = vrot.lane.b32.xlu0 %v92, 120
    %v106 = vpop.permute.xlu0 %105
    %v107 = vsel %vm102, %v104, -inf
    %v108 = vsel %vm102, %v106, -inf
    %v109 = vmax.f32 %v91, %v107
    %v110 = vmax.f32 %v92, %v108
    %v111 = vmax.f32 %v100, %v109
    %v112 = vmax.f32 %v101, %v110
    %113 = vrot.lane.b32.xlu0 %v100, 1
    %v114 = vpop.permute.xlu0 %113
    %115 = vrot.lane.b32.xlu0 %v101, 1
    %v116 = vpop.permute.xlu0 %115
    %v117 = vsel %vm39, %v114, -inf
    %v118 = vsel %vm39, %v116, -inf
    %vm119 = vcmp.eq.f32.partialorder %v23, %v111
    %vm120 = vcmp.eq.f32.partialorder %v24, %v112
    %vm121 = vcmp.eq.s32.totalorder %v38, 0
    %vm122 = vcmp.lt.f32.partialorder %v117, %v111
    %vm123 = vcmp.lt.f32.partialorder %v118, %v112
    %vm124 = vmor %vm121, %vm122
    %vm125 = vmor %vm121, %vm123
    %vm126 = vmand %vm119, %vm124
    %vm127 = vmand %vm120, %vm125
    %v128 = vsel %vm126, 1, 0
    %v129 = vsel %vm127, 1, 0
    %v130 = vcvt.s32.f32 %v128
    %v131 = vcvt.s32.f32 %v129
    %132 = vst [vmem:[#allocation5] sm:$0xff] %v130
    %133 = vst [vmem:[#allocation5 + $0x8] sm:$0xff] %v131
    // Predicated region
    $region10: #{tpu_custom_call.1} parent=1 // pred_check
      _
    $region11: #{tpu_custom_call.1} parent=1 // pred_check_branch
      %135 = sbr.rel (0) target = $region13
    $region12: #{tpu_custom_call.1} parent=1 // pred_region
      %s137 = ssub.s32 256, 256
      %138 = vsyncadd [#allocation4], %s137
      %s139 = sshll.u32 [#allocation5], 4
      %s140 = int_to_ptr.vmem [resolvable:$true] %s139
      %145 = dma.vmem_to_hbm [thread:$0]  %s140, 256, %s1, [#allocation4], 128, 128, 8
    $region13: #{tpu_custom_call.1} parent=1 // pred_fallthru
      _
    // Predicated region
    $region14: #{tpu_custom_call.1} parent=1 // pred_check
      _
    $region15: #{tpu_custom_call.1} parent=1 // pred_check_branch
      %147 = sbr.rel (0) target = $region17
    $region16: #{tpu_custom_call.1} parent=1 // pred_region
      %148 = dma.done [#allocation4], 256
    $region17: #{tpu_custom_call.1} parent=1 // pred_fallthru
      _
    %149 = vsyncpa [#allocation3], 1
    %150 = vsyncpa [#allocation4], 1

</llo_original>
